<compile_context>
chip_gen: v6e
topology: v6e:2x2x1
jax: 0.10.0
libtpu: 0.0.40
codegen_flags: <defaults>
</compile_context>

<pallas_src>
import jax
import jax.numpy as jnp
from jax.experimental import pallas as pl
from jax.experimental.pallas import tpu as pltpu

_MIB = 1024 * 1024
_TARGET_TILE = 16384          # rows per grid step, before VMEM capping
_FIXED_VMEM = 2 * _MIB        # weights (double-buffered) + misc slack


def _round_up(v, m):
    return -(-v // m) * m


def _physical_vmem_bytes():
    """Per-TensorCore VMEM capacity; conservative (v7x) fallback if unknown."""
    try:
        info = pltpu.get_tpu_info()
        cap = getattr(info, "vmem_capacity_bytes", None)
        if cap:
            return int(cap)
    except Exception:
        pass
    return 64 * _MIB


def _per_row_vmem_bytes(d_lanes, x_itemsize):
    """Rough per-batch-row VMEM cost of one grid step (lane-padded)."""
    x_blk = 2 * d_lanes * x_itemsize          # double-buffered x input block
    h_f32 = (128 + 128) * 4                   # h1 + h2 f32 intermediates
    h_bf16 = (d_lanes + 128 + 128) * 2        # bf16 copies of x, h1, h2
    out_blk = 2 * 8 * 4                       # (1,1,TB) f32 out, sublane-padded, dbuf
    return x_blk + h_f32 + h_bf16 + out_blk


def mlp_kernel(x_ref, w1_ref, b1_ref, w2_ref, b2_ref, w3_ref, b3_ref, o_ref):
    # ----- Layer 1: Linear + ReLU (bf16 MXU matmul, f32 accumulation) -----
    x = x_ref[...].astype(jnp.bfloat16)            # no-op if x already bf16
    h1 = jnp.dot(x, w1_ref[...], preferred_element_type=jnp.float32)
    h1 = jnp.maximum(h1 + b1_ref[...], 0.0)        # (TB, 128) f32

    # ----- Layer 2: Linear + ReLU -----
    h2 = jnp.dot(h1.astype(jnp.bfloat16), w2_ref[...],
                 preferred_element_type=jnp.float32)
    h2 = jnp.maximum(h2 + b2_ref[...], 0.0)        # (TB, 64) f32

    # ----- Layer 3: Linear (out_dim=1) + Sigmoid, lane-dense result -----
    # (1,64) x (TB,64) contracted on the minor dims (q.k^T pattern) so the
    # logits come out as a (1, TB) lane-dense row; MXU has plenty of slack.
    logits = jax.lax.dot_general(
        w3_ref[...], h2.astype(jnp.bfloat16),
        dimension_numbers=(((1,), (1,)), ((), ())),
        preferred_element_type=jnp.float32)        # (1, TB)
    o_ref[0] = jax.nn.sigmoid(logits + b3_ref[0, 0])


def mlp_forward(x, params, *, tile_b=None):
    w1, b1, w2, b2, w3, b3 = params
    B, D = x.shape
    H1 = w1.shape[1]
    H2 = w2.shape[1]

    d_lanes = max(128, _round_up(D, 128))
    x_itemsize = x.dtype.itemsize
    per_row = _per_row_vmem_bytes(d_lanes, x_itemsize)

    physical_vmem = _physical_vmem_bytes()
    budget = int(0.45 * physical_vmem) - _FIXED_VMEM
    max_tile = max(8, (budget // per_row) // 8 * 8)      # VMEM-derived cap

    if tile_b is None:
        tile_b = min(_TARGET_TILE, max_tile)
        if tile_b > 1024:
            tile_b = tile_b // 512 * 512
        if B <= tile_b:
            if B >= 1024:
                # Prefer >= 2 tiles so both v7x TensorCores get work
                # (no-op on single-TC v5e/v6e).
                tile_b = _round_up(-(-B // 2), 8)
            else:
                tile_b = _round_up(max(B, 8), 8)
    tile_b = max(8, min(_round_up(tile_b, 8), max_tile))

    # Pad batch to a tile multiple; zero rows give relu(b)-driven garbage
    # through sigmoid (finite, no NaN/Inf) and are sliced off below.
    b_pad = _round_up(B, tile_b)
    if b_pad != B:
        x = jnp.pad(x, ((0, b_pad - B), (0, 0)))
    num_tiles = b_pad // tile_b

    # VMEM limit: enough headroom over the estimated footprint, never the
    # whole physical VMEM (important on the 64 MiB v7x part).
    est_vmem = tile_b * per_row + _FIXED_VMEM
    vmem_limit = int(min(0.8 * physical_vmem, max(32 * _MIB, 2 * est_vmem)))

    flops = 2 * b_pad * (D * H1 + H1 * H2 + H2)
    bytes_accessed = (
        b_pad * D * x_itemsize + b_pad * 4
        + (D * H1 + H1 * H2 + H2) * w1.dtype.itemsize
        + (H1 + H2 + 1) * 4)

    out = pl.pallas_call(
        mlp_kernel,
        out_shape=jax.ShapeDtypeStruct((num_tiles, 1, tile_b), jnp.float32),
        grid=(num_tiles,),
        in_specs=[
            # x: batch-tiled, double-buffered by the pipeline.
            pl.BlockSpec((tile_b, D), lambda i: (i, 0)),
            # Weights / biases: constant index_map -> VMEM-resident, DMA'd once.
            pl.BlockSpec((D, H1), lambda i: (0, 0)),
            pl.BlockSpec((1, H1), lambda i: (0, 0)),
            pl.BlockSpec((H1, H2), lambda i: (0, 0)),
            pl.BlockSpec((1, H2), lambda i: (0, 0)),
            pl.BlockSpec((1, H2), lambda i: (0, 0)),
            # b3 scalar lives in SMEM.
            pl.BlockSpec(memory_space=pltpu.MemorySpace.SMEM),
        ],
        # Lane-dense output row per tile.
        out_specs=pl.BlockSpec((1, 1, tile_b), lambda i: (i, 0, 0)),
        compiler_params=pltpu.CompilerParams(
            dimension_semantics=("parallel",),
            vmem_limit_bytes=vmem_limit,
        ),
        cost_estimate=pl.CostEstimate(
            flops=int(flops),
            transcendentals=int(2 * b_pad),       # sigmoid: exp + reciprocal
            bytes_accessed=int(bytes_accessed),
        ),
    )(x, w1, b1, w2, b2, w3, b3)

    return out.reshape(-1)[:B].reshape(B, 1)


def init_params(key, input_dim, hidden_dims=(128, 64)):
    """Deterministic f32 init matching PyTorch nn.Linear shapes (w stored (in,out))."""
    h1, h2 = hidden_dims
    k1, k2, k3, k4, k5, k6 = jax.random.split(key, 6)

    def uniform(k, shape, fan_in):
        bound = 1.0 / jnp.sqrt(fan_in)
        return jax.random.uniform(k, shape, jnp.float32, -bound, bound)

    w1 = uniform(k1, (input_dim, h1), input_dim)
    b1 = uniform(k2, (1, h1), input_dim)
    w2 = uniform(k3, (h1, h2), h1)
    b2 = uniform(k4, (1, h2), h1)
    w3 = uniform(k5, (1, h2), h2)
    b3 = uniform(k6, (1, 1), h2)
    return (w1, b1, w2, b2, w3, b3)


def prepare_params(params):
    """Kernel-ready params: weights bf16 (MXU inputs), biases f32."""
    w1, b1, w2, b2, w3, b3 = params
    return (w1.astype(jnp.bfloat16), b1,
            w2.astype(jnp.bfloat16), b2,
            w3.astype(jnp.bfloat16), b3)


def mlp_reference(x, params):
    """Plain-JAX f32 reference of the same forward pass (upcasts bf16 params)."""
    w1, b1, w2, b2, w3, b3 = [p.astype(jnp.float32) for p in params]
    xf = x.astype(jnp.float32)
    h1 = jnp.maximum(xf @ w1 + b1, 0.0)
    h2 = jnp.maximum(h1 @ w2 + b2, 0.0)
    return jax.nn.sigmoid(h2 @ w3.T + b3)


if __name__ == "__main__":
    key = jax.random.PRNGKey(0)
    k_x, k_x2, k_p = jax.random.split(key, 3)

    input_dim = 32          # stands in for X_train_balanced.shape[1]
    hidden_dims = (128, 64)
    params = prepare_params(init_params(k_p, input_dim, hidden_dims))

    # Small demo batch (single tile), f32 input path.
    x = jax.random.normal(k_x, (8, input_dim), dtype=jnp.float32)
    out = jax.block_until_ready(mlp_forward(x, params))
    ref = mlp_reference(x, params)
    assert out.shape == (8, 1)
    assert jnp.allclose(out, ref, atol=3e-2), float(jnp.max(jnp.abs(out - ref)))

    # Multi-tile grid + padded last tile (forced small tile).
    x2 = jax.random.normal(k_x2, (20, input_dim), dtype=jnp.float32)
    out2 = jax.block_until_ready(mlp_forward(x2, params, tile_b=8))
    ref2 = mlp_reference(x2, params)
    assert out2.shape == (20, 1)
    assert jnp.allclose(out2, ref2, atol=3e-2), float(jnp.max(jnp.abs(out2 - ref2)))

    # bf16-input path (producer supplies bf16; no wrapper cast).
    out3 = jax.block_until_ready(
        mlp_forward(x2.astype(jnp.bfloat16), params, tile_b=16))
    assert out3.shape == (20, 1)
    assert jnp.allclose(out3, ref2, atol=4e-2), float(jnp.max(jnp.abs(out3 - ref2)))

    print("KERNEL_OK")
</pallas_src>

<mosaic_0001>
module attributes {stable_mosaic.version = 11 : i64} {
  func.func @mlp_kernel(%arg0: i32, %arg1: memref<8x32xf32, #tpu.memory_space<vmem>>, %arg2: memref<32x128xbf16, #tpu.memory_space<vmem>>, %arg3: memref<1x128xf32, #tpu.memory_space<vmem>>, %arg4: memref<128x64xbf16, #tpu.memory_space<vmem>>, %arg5: memref<1x64xf32, #tpu.memory_space<vmem>>, %arg6: memref<1x64xbf16, #tpu.memory_space<vmem>>, %arg7: memref<1x1xf32, #tpu.memory_space<smem>>, %arg8: memref<1x1x8xf32, #tpu.memory_space<vmem>>) attributes {dimension_semantics = [#tpu.dimension_semantics<parallel>], iteration_bounds = array<i64: 1>, scalar_prefetch = 0 : i64, scratch_operands = 0 : i64, tpu.core_type = #tpu.core_type<tc>, window_params = [{transform_indices = @transform_0, window_bounds = array<i64: 8, 32>}, {pipeline_mode = #tpu.pipeline_mode<synchronous>, transform_indices = @transform_1, window_bounds = array<i64: 32, 128>}, {pipeline_mode = #tpu.pipeline_mode<synchronous>, transform_indices = @transform_2, window_bounds = array<i64: 1, 128>}, {pipeline_mode = #tpu.pipeline_mode<synchronous>, transform_indices = @transform_3, window_bounds = array<i64: 128, 64>}, {pipeline_mode = #tpu.pipeline_mode<synchronous>, transform_indices = @transform_4, window_bounds = array<i64: 1, 64>}, {pipeline_mode = #tpu.pipeline_mode<synchronous>, transform_indices = @transform_5, window_bounds = array<i64: 1, 64>}, {transform_indices = @transform_6, window_bounds = array<i64: 1, 1>}, {transform_indices = @transform_7, window_bounds = array<i64: 1, 1, 8>}]} {
    %c0 = arith.constant 0 : index
    %c0_0 = arith.constant 0 : index
    %0 = vector.load %arg1[%c0, %c0_0] : memref<8x32xf32, #tpu.memory_space<vmem>>, vector<8x32xf32>
    %1 = arith.truncf %0 : vector<8x32xf32> to vector<8x32xbf16>
    %c0_1 = arith.constant 0 : index
    %c0_2 = arith.constant 0 : index
    %2 = vector.load %arg2[%c0_1, %c0_2] : memref<32x128xbf16, #tpu.memory_space<vmem>>, vector<32x128xbf16>
    %cst = arith.constant dense<0.000000e+00> : vector<8x128xf32>
    %3 = tpu.matmul %1, %2, %cst {dimension_numbers = #tpu.dot_dimension_numbers<[1], [0], [0], [1], [0, 0, 1, 1], [], []>} : vector<8x32xbf16>, vector<32x128xbf16>, vector<8x128xf32> -> vector<8x128xf32>
    %c0_3 = arith.constant 0 : index
    %c0_4 = arith.constant 0 : index
    %4 = vector.load %arg3[%c0_3, %c0_4] : memref<1x128xf32, #tpu.memory_space<vmem>>, vector<1x128xf32>
    %5 = vector.broadcast %4 : vector<1x128xf32> to vector<8x128xf32>
    %6 = arith.addf %3, %5 : vector<8x128xf32>
    %cst_5 = arith.constant 0.000000e+00 : f32
    %7 = vector.broadcast %cst_5 : f32 to vector<8x128xf32>
    %8 = arith.maximumf %6, %7 : vector<8x128xf32>
    %9 = arith.truncf %8 : vector<8x128xf32> to vector<8x128xbf16>
    %c0_6 = arith.constant 0 : index
    %c0_7 = arith.constant 0 : index
    %10 = vector.load %arg4[%c0_6, %c0_7] : memref<128x64xbf16, #tpu.memory_space<vmem>>, vector<128x64xbf16>
    %cst_8 = arith.constant dense<0.000000e+00> : vector<8x64xf32>
    %11 = tpu.matmul %9, %10, %cst_8 {dimension_numbers = #tpu.dot_dimension_numbers<[1], [0], [0], [1], [0, 0, 1, 1], [], []>} : vector<8x128xbf16>, vector<128x64xbf16>, vector<8x64xf32> -> vector<8x64xf32>
    %c0_9 = arith.constant 0 : index
    %c0_10 = arith.constant 0 : index
    %12 = vector.load %arg5[%c0_9, %c0_10] : memref<1x64xf32, #tpu.memory_space<vmem>>, vector<1x64xf32>
    %13 = vector.broadcast %12 : vector<1x64xf32> to vector<8x64xf32>
    %14 = arith.addf %11, %13 : vector<8x64xf32>
    %cst_11 = arith.constant 0.000000e+00 : f32
    %15 = vector.broadcast %cst_11 : f32 to vector<8x64xf32>
    %16 = arith.maximumf %14, %15 : vector<8x64xf32>
    %c0_12 = arith.constant 0 : index
    %c0_13 = arith.constant 0 : index
    %17 = vector.load %arg6[%c0_12, %c0_13] : memref<1x64xbf16, #tpu.memory_space<vmem>>, vector<1x64xbf16>
    %18 = arith.truncf %16 : vector<8x64xf32> to vector<8x64xbf16>
    %cst_14 = arith.constant dense<0.000000e+00> : vector<1x8xf32>
    %19 = tpu.matmul %17, %18, %cst_14 {dimension_numbers = #tpu.dot_dimension_numbers<[1], [1], [0], [0], [0, 0, 1, 0], [], []>} : vector<1x64xbf16>, vector<8x64xbf16>, vector<1x8xf32> -> vector<1x8xf32>
    %c0_15 = arith.constant 0 : index
    %c0_16 = arith.constant 0 : index
    %20 = memref.load %arg7[%c0_15, %c0_16] : memref<1x1xf32, #tpu.memory_space<smem>>
    %21 = vector.broadcast %20 : f32 to vector<1x8xf32>
    %22 = arith.addf %19, %21 : vector<1x8xf32>
    %23 = arith.negf %22 : vector<1x8xf32>
    %24 = math.exp %23 : vector<1x8xf32>
    %cst_17 = arith.constant 1.000000e+00 : f32
    %25 = vector.broadcast %cst_17 : f32 to vector<1x8xf32>
    %26 = arith.addf %25, %24 : vector<1x8xf32>
    %27 = arith.divf %25, %26 : vector<1x8xf32>
    %c0_18 = arith.constant 0 : index
    %c0_19 = arith.constant 0 : index
    %c0_20 = arith.constant 0 : index
    %28 = vector.load %arg8[%c0_18, %c0_19, %c0_20] : memref<1x1x8xf32, #tpu.memory_space<vmem>>, vector<1x1x8xf32>
    %29 = vector.shape_cast %28 : vector<1x1x8xf32> to vector<1x8xf32>
    %30 = vector.shape_cast %27 : vector<1x8xf32> to vector<1x1x8xf32>
    tpu.vector_store %arg8[%c0_18, %c0_19, %c0_20], %30 {strides = array<i32>} : memref<1x1x8xf32, #tpu.memory_space<vmem>>, vector<1x1x8xf32>,
    return
  }
  func.func @transform_0(%arg0: i32) -> (i32, i32) {
    %c0_i32 = arith.constant 0 : i32
    %c0_i32_0 = arith.constant 0 : i32
    return %arg0, %c0_i32 : i32, i32
  }
  func.func @transform_1(%arg0: i32) -> (i32, i32) {
    %c0_i32 = arith.constant 0 : i32
    %c0_i32_0 = arith.constant 0 : i32
    %c0_i32_1 = arith.constant 0 : i32
    return %c0_i32, %c0_i32_0 : i32, i32
  }
  func.func @transform_2(%arg0: i32) -> (i32, i32) {
    %c0_i32 = arith.constant 0 : i32
    %c0_i32_0 = arith.constant 0 : i32
    %c0_i32_1 = arith.constant 0 : i32
    return %c0_i32, %c0_i32_0 : i32, i32
  }
  func.func @transform_3(%arg0: i32) -> (i32, i32) {
    %c0_i32 = arith.constant 0 : i32
    %c0_i32_0 = arith.constant 0 : i32
    %c0_i32_1 = arith.constant 0 : i32
    return %c0_i32, %c0_i32_0 : i32, i32
  }
  func.func @transform_4(%arg0: i32) -> (i32, i32) {
    %c0_i32 = arith.constant 0 : i32
    %c0_i32_0 = arith.constant 0 : i32
    %c0_i32_1 = arith.constant 0 : i32
    return %c0_i32, %c0_i32_0 : i32, i32
  }
  func.func @transform_5(%arg0: i32) -> (i32, i32) {
    %c0_i32 = arith.constant 0 : i32
    %c0_i32_0 = arith.constant 0 : i32
    %c0_i32_1 = arith.constant 0 : i32
    return %c0_i32, %c0_i32_0 : i32, i32
  }
  func.func @transform_6(%arg0: i32) -> (i32, i32) {
    %c0_i32 = arith.constant 0 : i32
    %c0_i32_0 = arith.constant 0 : i32
    %c0_i32_1 = arith.constant 0 : i32
    return %c0_i32, %c0_i32_0 : i32, i32
  }
  func.func @transform_7(%arg0: i32) -> (i32, i32, i32) {
    %c0_i32 = arith.constant 0 : i32
    %c0_i32_0 = arith.constant 0 : i32
    %c0_i32_1 = arith.constant 0 : i32
    return %arg0, %c0_i32, %c0_i32_0 : i32, i32, i32
  }
}

</mosaic_0001>

<llo_original>
// kernel: tpu_custom_call.1
$region0: #{tpu_custom_call.1}
  #allocation0 [shape = 'u32[]', space=smem, size = 0x4, offset = 0x4, fixed_abs, tag = 'smem constant byte address 0x4 - core index']
  #allocation1 [shape = 'u32[144,128]{1,0:T(1,128)}', space=vmem, size = 0x12000, scoped, tag = 'internal scratch']
  #allocation2 [shape = 'f32[1,1]{1,0:T(1,128)S(6)}', space=smem, size = 0x200, scoped, tag = 'scoped memory for tpu_custom_call.1']
  %s0 = inlined_call_operand.vmem [shape: f32[8,32], index: 0, kind: input, shape index: {}]
  %s1 = inlined_call_operand.vmem [shape: bf16[32,128], index: 1, kind: input, shape index: {}]
  %s2 = inlined_call_operand.vmem [shape: f32[1,128], index: 2, kind: input, shape index: {}]
  %s3 = inlined_call_operand.vmem [shape: bf16[128,64], index: 3, kind: input, shape index: {}]
  %s4 = inlined_call_operand.vmem [shape: f32[1,64], index: 4, kind: input, shape index: {}]
  %s5 = inlined_call_operand.vmem [shape: bf16[1,64], index: 5, kind: input, shape index: {}]
  %s6 = inlined_call_operand.<no memory space> [shape: f32[1,1], index: 6, kind: input, shape index: {}]
  %s7 = inlined_call_operand.hbm [shape: f32[1,1,8], index: 7, kind: output, shape index: {}]
  %s8 = sld [smem:[#allocation0]]
  $region38: #{tpu_custom_call.1} parent=0
    _
  %s10 = ssub.s32 1, %s8
  %s11 = scalar_select 0, %s10, %s8
  %12 = sst [smem:[#allocation2]] %s6
  $region1: #{tpu_custom_call.1} parent=0
    #allocation3 [shape = 'u8[512]{0}', space=vmem, size = 0x400, scoped, tag = 'output window, operand 0, single buffered']
    #allocation4 [shape = 's32[1]{0}', space=sflag, size = 0x4, scoped, tag = 'scoped memory for tpu_custom_call.1']
    %13 = vsyncpa [#allocation4], 0
    // Predicated region
    $region2: #{tpu_custom_call.1} parent=1 // pred_check
      _
    $region3: #{tpu_custom_call.1} parent=1 // pred_check_branch
      %15 = sbr.rel (0) target = $region5
    $region4: #{tpu_custom_call.1} parent=1 // pred_region
      _
    $region5: #{tpu_custom_call.1} parent=1 // pred_fallthru
      _
    // Predicated region
    $region6: #{tpu_custom_call.1} parent=1 // pred_check
      _
    $region7: #{tpu_custom_call.1} parent=1 // pred_check_branch
      %17 = sbr.rel (0) target = $region9
    $region8: #{tpu_custom_call.1} parent=1 // pred_region
      _
    $region9: #{tpu_custom_call.1} parent=1 // pred_fallthru
      _
    // Predicated region
    $region10: #{tpu_custom_call.1} parent=1 // pred_check
      _
    $region11: #{tpu_custom_call.1} parent=1 // pred_check_branch
      %19 = sbr.rel (0) target = $region13
    $region12: #{tpu_custom_call.1} parent=1 // pred_region
      _
    $region13: #{tpu_custom_call.1} parent=1 // pred_fallthru
      _
    // Predicated region
    $region14: #{tpu_custom_call.1} parent=1 // pred_check
      _
    $region15: #{tpu_custom_call.1} parent=1 // pred_check_branch
      %21 = sbr.rel (0) target = $region17
    $region16: #{tpu_custom_call.1} parent=1 // pred_region
      _
    $region17: #{tpu_custom_call.1} parent=1 // pred_fallthru
      _
    // Predicated region
    $region18: #{tpu_custom_call.1} parent=1 // pred_check
      _
    $region19: #{tpu_custom_call.1} parent=1 // pred_check_branch
      %23 = sbr.rel (0) target = $region21
    $region20: #{tpu_custom_call.1} parent=1 // pred_region
      _
    $region21: #{tpu_custom_call.1} parent=1 // pred_fallthru
      _
    // Predicated region
    $region22: #{tpu_custom_call.1} parent=1 // pred_check
      _
    $region23: #{tpu_custom_call.1} parent=1 // pred_check_branch
      %25 = sbr.rel (0) target = $region25
    $region24: #{tpu_custom_call.1} parent=1 // pred_region
      _
    $region25: #{tpu_custom_call.1} parent=1 // pred_fallthru
      _
    // Predicated region
    $region26: #{tpu_custom_call.1} parent=1 // pred_check
      _
    $region27: #{tpu_custom_call.1} parent=1 // pred_check_branch
      %27 = sbr.rel (0) target = $region29
    $region28: #{tpu_custom_call.1} parent=1 // pred_region
      _
    $region29: #{tpu_custom_call.1} parent=1 // pred_fallthru
      _
    %v29 = vld [vmem:[%s0] sm:$0xff]
    %v30 = vpack.c.bf16 %v29, %v29
    %v31 = vld [vmem:[%s1] sm:$0xf]
    %v32 = vld [vmem:[%s1 + $0x4] sm:$0xf]
    %v33 = vld [vmem:[%s1 + $0x8] sm:$0xf]
    %v34 = vld [vmem:[%s1 + $0xc] sm:$0xf]
    %v35 = vld [vmem:[%s2] sm:$0x1]
    %v37 = vlaneseq
    %v38 = vshrl.u32 %v37, 7
    %v39 = vsub.s32 0, %v38
    %v40 = vrot.slane %v35, %v39
    %v46 = vunpack.c.l.b16 %v31
    %v47 = vunpack.c.l.b16 %v32
    %v48 = vunpack.c.l.b16 %v33
    %v49 = vunpack.c.l.b16 %v34
    %v50 = vpack.c.b16 %v47, %v46
    %v51 = vpack.c.b16 %v49, %v48
    %vm54 = vcmask 261120
    %v56 = vsel %vm54, %v30, 0
    %58 = vmatprep.subr.bf16.mxu0 0
    %59 = vmatpush1.bf16.msra.mxu0 0
    %60 = vmatprep.subr.bf16.mxu0 0
    %61 = vmatpush1.bf16.msra.mxu0 0
    %62 = vmatprep.subr.bf16.mxu0 0
    %63 = vmatpush1.bf16.msra.mxu0 0
    %64 = vmatprep.subr.bf16.mxu0 0
    %65 = vmatpush1.bf16.msra.mxu0 0
    %66 = vmatprep.subr.bf16.mxu0 0
    %67 = vmatpush1.bf16.msra.mxu0 0
    %68 = vmatprep.subr.bf16.mxu0 0
    %69 = vmatpush1.bf16.msra.mxu0 0
    %70 = vmatprep.subr.bf16.mxu0 0
    %71 = vmatpush1.bf16.msra.mxu0 %v51
    %72 = vmatprep.subr.bf16.mxu0 0
    %73 = vmatpush1.bf16.msra.mxu0 %v50
    %74 = vmatprep.subr.bf16.mxu0 0
    %75 = vmatpush2.bf16.msra.mxu0 0
    %76 = vmatprep.subr.bf16.mxu0 0
    %77 = vmatpush2.bf16.msra.mxu0 0
    %78 = vmatprep.subr.bf16.mxu0 0
    %79 = vmatpush2.bf16.msra.mxu0 0
    %80 = vmatprep.subr.bf16.mxu0 0
    %81 = vmatpush2.bf16.msra.mxu0 0
    %82 = vmatprep.subr.bf16.mxu0 0
    %83 = vmatpush2.bf16.msra.mxu0 0
    %84 = vmatprep.subr.bf16.mxu0 0
    %85 = vmatpush2.bf16.msra.mxu0 0
    %86 = vmatprep.subr.bf16.mxu0 0
    %87 = vmatpush2.bf16.msra.mxu0 0
    %88 = vmatprep.subr.bf16.mxu0 0
    %89 = vmatpush2.bf16.msra.mxu0 0
    %90 = vmatprep.mubr.bf16.mxu0 0
    %91 = vmatmul.mubr.bf16.gmra.mxu0 %v56
    %v92 = vpop.f32.mrf.mxu0
    %v93 = vadd.f32 %v40, %v92
    %v94 = vpop.f32.mrf.mxu0
    %v95 = vpop.f32.mrf.mxu0
    %v96 = vpop.f32.mrf.mxu0
    %97 = vdwg.mxu0
    %v98 = vmax.f32 %v93, 0.0
    %v99 = vpack.c.bf16 %v98, %v98
    %v100 = vld [vmem:[%s3] sm:$0xf]
    %v101 = vld [vmem:[%s3 + $0x4] sm:$0xf]
    %v102 = vld [vmem:[%s3 + $0x8] sm:$0xf]
    %v103 = vld [vmem:[%s3 + $0xc] sm:$0xf]
    %v104 = vld [vmem:[%s3 + $0x10] sm:$0xf]
    %v105 = vld [vmem:[%s3 + $0x14] sm:$0xf]
    %v106 = vld [vmem:[%s3 + $0x18] sm:$0xf]
    %v107 = vld [vmem:[%s3 + $0x1c] sm:$0xf]
    %v108 = vld [vmem:[%s3 + $0x20] sm:$0xf]
    %v109 = vld [vmem:[%s3 + $0x24] sm:$0xf]
    %v110 = vld [vmem:[%s3 + $0x28] sm:$0xf]
    %v111 = vld [vmem:[%s3 + $0x2c] sm:$0xf]
    %v112 = vld [vmem:[%s3 + $0x30] sm:$0xf]
    %v113 = vld [vmem:[%s3 + $0x34] sm:$0xf]
    %v114 = vld [vmem:[%s3 + $0x38] sm:$0xf]
    %v115 = vld [vmem:[%s3 + $0x3c] sm:$0xf]
    %v116 = vld [vmem:[%s4] sm:$0x1]
    %v118 = vlaneseq
    %v119 = vshrl.u32 %v118, 7
    %v120 = vsub.s32 0, %v119
    %v121 = vrot.slane %v116, %v120
    %v139 = vunpack.c.l.b16 %v100
    %v140 = vunpack.c.l.b16 %v101
    %v141 = vunpack.c.l.b16 %v102
    %v142 = vunpack.c.l.b16 %v103
    %v143 = vunpack.c.l.b16 %v104
    %v144 = vunpack.c.l.b16 %v105
    %v145 = vunpack.c.l.b16 %v106
    %v146 = vunpack.c.l.b16 %v107
    %v147 = vunpack.c.l.b16 %v108
    %v148 = vunpack.c.l.b16 %v109
    %v149 = vunpack.c.l.b16 %v110
    %v150 = vunpack.c.l.b16 %v111
    %v151 = vunpack.c.l.b16 %v112
    %v152 = vunpack.c.l.b16 %v113
    %v153 = vunpack.c.l.b16 %v114
    %v154 = vunpack.c.l.b16 %v115
    %v155 = vpack.c.b16 %v140, %v139
    %v156 = vpack.c.b16 %v142, %v141
    %v157 = vpack.c.b16 %v144, %v143
    %v158 = vpack.c.b16 %v146, %v145
    %v159 = vpack.c.b16 %v148, %v147
    %v160 = vpack.c.b16 %v150, %v149
    %v161 = vpack.c.b16 %v152, %v151
    %v162 = vpack.c.b16 %v154, %v153
    %171 = vmatprep.subr.bf16.mxu0 0
    %172 = vmatpush1.bf16.msra.mxu0 %v162
    %173 = vmatprep.subr.bf16.mxu0 0
    %174 = vmatpush1.bf16.msra.mxu0 %v161
    %175 = vmatprep.subr.bf16.mxu0 0
    %176 = vmatpush1.bf16.msra.mxu0 %v160
    %177 = vmatprep.subr.bf16.mxu0 0
    %178 = vmatpush1.bf16.msra.mxu0 %v159
    %179 = vmatprep.subr.bf16.mxu0 0
    %180 = vmatpush1.bf16.msra.mxu0 %v158
    %181 = vmatprep.subr.bf16.mxu0 0
    %182 = vmatpush1.bf16.msra.mxu0 %v157
    %183 = vmatprep.subr.bf16.mxu0 0
    %184 = vmatpush1.bf16.msra.mxu0 %v156
    %185 = vmatprep.subr.bf16.mxu0 0
    %186 = vmatpush1.bf16.msra.mxu0 %v155
    %187 = vmatprep.subr.bf16.mxu0 0
    %188 = vmatpush2.bf16.msra.mxu0 0
    %189 = vmatprep.subr.bf16.mxu0 0
    %190 = vmatpush2.bf16.msra.mxu0 0
    %191 = vmatprep.subr.bf16.mxu0 0
    %192 = vmatpush2.bf16.msra.mxu0 0
    %193 = vmatprep.subr.bf16.mxu0 0
    %194 = vmatpush2.bf16.msra.mxu0 0
    %195 = vmatprep.subr.bf16.mxu0 0
    %196 = vmatpush2.bf16.msra.mxu0 0
    %197 = vmatprep.subr.bf16.mxu0 0
    %198 = vmatpush2.bf16.msra.mxu0 0
    %199 = vmatprep.subr.bf16.mxu0 0
    %200 = vmatpush2.bf16.msra.mxu0 0
    %201 = vmatprep.subr.bf16.mxu0 0
    %202 = vmatpush2.bf16.msra.mxu0 0
    %203 = vmatprep.mubr.bf16.mxu0 0
    %204 = vmatmul.mubr.bf16.gmra.mxu0 %v99
    %v205 = vpop.f32.mrf.mxu0
    %v206 = vadd.f32 %v121, %v205
    %v207 = vpop.f32.mrf.mxu0
    %v208 = vpop.f32.mrf.mxu0
    %v209 = vpop.f32.mrf.mxu0
    %210 = vdwg.mxu0
    %v211 = vmax.f32 %v206, 0.0
    %v212 = vld [vmem:[%s5] sm:$0x1]
    %v213 = vpack.c.bf16 %v211, %v211
    %s214 = sld [smem:[#allocation2]]
    %v215 = vstv %s214
    %vm216 = vcmask 523264
    %v218 = vsel %vm216, %v212, 0
    %v221 = vsel %vm216, %v213, 0
    %223 = vmatprep.subr.bf16.mxu0 0
    %224 = vmatpush1.bf16.xpose.msra.mxu0 0
    %225 = vmatprep.subr.bf16.mxu0 0
    %226 = vmatpush1.bf16.xpose.msra.mxu0 0
    %227 = vmatprep.subr.bf16.mxu0 0
    %228 = vmatpush1.bf16.xpose.msra.mxu0 0
    %229 = vmatprep.subr.bf16.mxu0 0
    %230 = vmatpush1.bf16.xpose.msra.mxu0 0
    %231 = vmatprep.subr.bf16.mxu0 0
    %232 = vmatpush1.bf16.xpose.msra.mxu0 0
    %233 = vmatprep.subr.bf16.mxu0 0
    %234 = vmatpush1.bf16.xpose.msra.mxu0 0
    %235 = vmatprep.subr.bf16.mxu0 0
    %236 = vmatpush1.bf16.xpose.msra.mxu0 0
    %237 = vmatprep.subr.bf16.mxu0 0
    %238 = vmatpush1.bf16.xpose.msra.mxu0 %v221
    %239 = vmatprep.subr.bf16.mxu0 0
    %240 = vmatpush2.bf16.xpose.msra.mxu0 0
    %241 = vmatprep.subr.bf16.mxu0 0
    %242 = vmatpush2.bf16.xpose.msra.mxu0 0
    %243 = vmatprep.subr.bf16.mxu0 0
    %244 = vmatpush2.bf16.xpose.msra.mxu0 0
    %245 = vmatprep.subr.bf16.mxu0 0
    %246 = vmatpush2.bf16.xpose.msra.mxu0 0
    %247 = vmatprep.subr.bf16.mxu0 0
    %248 = vmatpush2.bf16.xpose.msra.mxu0 0
    %249 = vmatprep.subr.bf16.mxu0 0
    %250 = vmatpush2.bf16.xpose.msra.mxu0 0
    %251 = vmatprep.subr.bf16.mxu0 0
    %252 = vmatpush2.bf16.xpose.msra.mxu0 0
    %253 = vmatprep.subr.bf16.mxu0 0
    %254 = vmatpush2.bf16.xpose.msra.mxu0 0
    %255 = vmatprep.mubr.bf16.mxu0 0
    %256 = vmatmul.mubr.bf16.gmra.mxu0 %v218
    %v257 = vpop.f32.mrf.mxu0
    %v258 = vadd.f32 %v215, %v257
    %v259 = vpop.f32.mrf.mxu0
    %v260 = vpop.f32.mrf.mxu0
    %v261 = vpop.f32.mrf.mxu0
    %262 = vdwg.mxu0
    %v263 = vxor.u32 %v258, 2147483648
    %v264 = vmul.f32 %v263, 1.442695
    %v265 = vpow.pop %v264
    %v266 = vadd.f32 %v265, 1.0
    %v267 = vrcp.pop %v266
    %v268 = vmul.f32 1.0, %v267
    %vm269 = vcmask 57344
    %270 = vst.msk [vmem:[#allocation3] sm:$0x1] %vm269, %v268
    // Predicated region
    $region30: #{tpu_custom_call.1} parent=1 // pred_check
      _
    $region31: #{tpu_custom_call.1} parent=1 // pred_check_branch
      %272 = sbr.rel (0) target = $region33
    $region32: #{tpu_custom_call.1} parent=1 // pred_region
      %s274 = ssub.s32 16, 16
      %275 = vsyncadd [#allocation4], %s274
      %s277 = sshll.u32 [#allocation3], 4
      %s278 = int_to_ptr.vmem [resolvable:$true] %s277
      %280 = dma.vmem_to_hbm [thread:$0]  %s278, 16, %s7, [#allocation4]
    $region33: #{tpu_custom_call.1} parent=1 // pred_fallthru
      _
    // Predicated region
    $region34: #{tpu_custom_call.1} parent=1 // pred_check
      _
    $region35: #{tpu_custom_call.1} parent=1 // pred_check_branch
      %282 = sbr.rel (0) target = $region37
    $region36: #{tpu_custom_call.1} parent=1 // pred_region
      %283 = dma.done [#allocation4], 16
    $region37: #{tpu_custom_call.1} parent=1 // pred_fallthru
      _
    %284 = vsyncpa [#allocation4], 1

</llo_original>
